<compile_context>
chip_gen: v7x
topology: tpu7x:2x2x1
jax: 0.10.0
libtpu: 0.0.40
codegen_flags: <defaults>
</compile_context>

<pallas_src>
import jax
import jax.numpy as jnp
import numpy as np
from jax import lax
from jax.experimental import pallas as pl
from jax.experimental.pallas import tpu as pltpu


def _triplet_tile_kernel(xr_ref, xc_ref, sqr_ref, sqc_ref,
                         labr_ref, labc_ref, ap_ref, an_ref):
    """One (TM, TN) tile of the pairwise squared-distance matrix; running
    hardest-positive max / hardest-negative min per row accumulated in the
    (TM, 1) output refs (VMEM-resident across the column grid axis)."""
    j = pl.program_id(1)

    # New row block: reset the accumulators.
    @pl.when(j == 0)
    def _():
        ap_ref[...] = jnp.full(ap_ref.shape, -jnp.inf, dtype=ap_ref.dtype)
        an_ref[...] = jnp.full(an_ref.shape, jnp.inf, dtype=an_ref.dtype)

    # Gram tile on the MXU; contract the last dim of BOTH operands -> no transpose.
    gram = lax.dot_general(
        xr_ref[...], xc_ref[...],
        dimension_numbers=(((1,), (1,)), ((), ())),
        preferred_element_type=jnp.float32,
    )                                                            # (TM, TN)

    # Squared distances; NOTE: reference drops the .sqrt() result -> no sqrt here.
    # Padded columns carry sq_col = +inf -> dist = +inf (never a hardest negative
    # unless the row has no real negatives, matching the unpadded reference).
    d2 = sqr_ref[...] + sqc_ref[...] - 2.0 * gram                # (TM,1)+(1,TN)
    dist = jnp.maximum(d2, 1e-12)

    # Padded columns have label -1 -> never equal to a real row label -> never a
    # positive.  No separate validity mask / logical ops needed.
    same = labr_ref[...] == labc_ref[...]                        # (TM, TN) bool

    ap_tile = jnp.max(jnp.where(same, dist, -jnp.inf), axis=1, keepdims=True)
    an_tile = jnp.min(jnp.where(same, jnp.inf, dist), axis=1, keepdims=True)

    ap_ref[...] = jnp.maximum(ap_ref[...], ap_tile)
    an_ref[...] = jnp.minimum(an_ref[...], an_tile)


def _round_up(x, m):
    return ((x + m - 1) // m) * m


def _vmem_bytes(tm, tn, d, itemsize):
    # double-buffered x row/col blocks + f32 gram/dist/select temporaries + vectors
    return 2 * (tm + tn) * d * itemsize + 6 * tm * tn * 4 + 8 * (tm + tn) * 4


def triplet_loss(inputs, labels, margin=0.3, *, use_bf16_matmul=False):
    """inputs: (N, D) float features; labels: (N,) int class ids.

    Returns (loss, prec) matching the PyTorch TripletLoss.forward.
    use_bf16_matmul=True feeds the MXU bf16 operands (f32 accumulation): faster and
    half the HBM traffic on every TPU generation, but not bit-identical to f32.
    """
    n, d = inputs.shape
    x = inputs.astype(jnp.float32)
    labels = labels.astype(jnp.int32)

    # ---- tile selection ------------------------------------------------------
    if n <= 128:
        # Single full tile; no padding overhead beyond sublane rounding.
        n_pad = _round_up(n, 8)
        tm = tn = n_pad
    else:
        # >=2 row blocks (so v7x's two TensorCores both get work via the "parallel"
        # row axis), up to 512-wide tiles for large N (halves column re-streaming
        # vs 256 and amortizes per-grid-step overhead).
        tm = min(512, _round_up(-(-n // 2), 128))
        n_pad = _round_up(n, tm)
        tn = tm

    pad = n_pad - n
    if pad:
        x = jnp.pad(x, ((0, pad), (0, 0)))
        labels_p = jnp.pad(labels, (0, pad), constant_values=-1)
    else:
        labels_p = labels

    # ---- dtype / feature-dim layout -----------------------------------------
    if use_bf16_matmul:
        x_mm = x.astype(jnp.bfloat16)
        x_sq_src = x_mm.astype(jnp.float32)   # norms from the SAME bf16 features
    else:
        x_mm = x
        x_sq_src = x

    d_pad = d
    if d >= 512 and d % 128 != 0:
        # Only worth aligning the MXU contraction dim once the MXU (not the VPU)
        # is the saturated slot.
        d_pad = _round_up(d, 128)
        x_mm = jnp.pad(x_mm, ((0, 0), (0, d_pad - d)))

    itemsize = x_mm.dtype.itemsize
    # Cap TN at 256 if a very large D would push past v7x's 64 MiB VMEM.
    while tn > 256 and _vmem_bytes(tm, tn, d_pad, itemsize) > (48 << 20):
        tn //= 2

    # ---- wrapper-side layouts (both orientations -> no in-kernel transposes) --
    sq = jnp.sum(x_sq_src * x_sq_src, axis=1)                    # (n_pad,)
    col_valid = jnp.arange(n_pad) < n
    sq_row = sq.reshape(n_pad, 1)
    # Fold column validity into the data: padded columns get +inf squared norm.
    sq_col = jnp.where(col_valid, sq, jnp.inf).reshape(1, n_pad)
    lab_row = labels_p.reshape(n_pad, 1)
    lab_col = labels_p.reshape(1, n_pad)

    grid = (n_pad // tm, n_pad // tn)

    vmem_need = _vmem_bytes(tm, tn, d_pad, itemsize)
    vmem_limit = int(min(max(2 * vmem_need, 32 << 20), 64 << 20))

    x_bytes = n_pad * d_pad * itemsize
    cost = pl.CostEstimate(
        flops=2 * n_pad * n_pad * d_pad,
        transcendentals=0,
        bytes_accessed=int(x_bytes * (1 + grid[0]) + 4 * n_pad * 4 * grid[0]
                           + 2 * n_pad * 4),
    )

    ap, an = pl.pallas_call(
        _triplet_tile_kernel,
        grid=grid,
        in_specs=[
            pl.BlockSpec((tm, d_pad), lambda i, j: (i, 0)),   # x row block (resident)
            pl.BlockSpec((tn, d_pad), lambda i, j: (j, 0)),   # x col block (streamed)
            pl.BlockSpec((tm, 1), lambda i, j: (i, 0)),       # ||x||^2 rows
            pl.BlockSpec((1, tn), lambda i, j: (0, j)),       # ||x||^2 cols (+inf pad)
            pl.BlockSpec((tm, 1), lambda i, j: (i, 0)),       # labels rows
            pl.BlockSpec((1, tn), lambda i, j: (0, j)),       # labels cols (-1 pad)
        ],
        out_specs=(
            pl.BlockSpec((tm, 1), lambda i, j: (i, 0)),       # dist_ap accumulator
            pl.BlockSpec((tm, 1), lambda i, j: (i, 0)),       # dist_an accumulator
        ),
        out_shape=(
            jax.ShapeDtypeStruct((n_pad, 1), jnp.float32),
            jax.ShapeDtypeStruct((n_pad, 1), jnp.float32),
        ),
        compiler_params=pltpu.CompilerParams(
            dimension_semantics=("parallel", "arbitrary"),
            vmem_limit_bytes=vmem_limit),
        cost_estimate=cost,
    )(x_mm, x_mm, sq_row, sq_col, lab_row, lab_col)

    dist_ap = ap[:n, 0]
    dist_an = an[:n, 0]
    # MarginRankingLoss(margin)(dist_an, dist_ap, y=1) = mean(relu(dist_ap - dist_an + margin))
    loss = jnp.mean(jnp.maximum(dist_ap - dist_an + margin, 0.0))
    prec = jnp.sum((dist_an > dist_ap).astype(jnp.float32)) / jnp.float32(n)
    return loss, prec


def _triplet_loss_ref(inputs, labels, margin=0.3):
    """Pure-JAX reference mirroring the PyTorch forward exactly."""
    x = inputs.astype(jnp.float32)
    n = x.shape[0]
    sq = jnp.sum(x * x, axis=1, keepdims=True)
    d2 = sq + sq.T - 2.0 * (x @ x.T)
    dist = jnp.maximum(d2, 1e-12)          # sqrt result discarded in the reference
    same = labels[:, None] == labels[None, :]
    dist_ap = jnp.max(jnp.where(same, dist, -jnp.inf), axis=1)
    dist_an = jnp.min(jnp.where(same, jnp.inf, dist), axis=1)
    loss = jnp.mean(jnp.maximum(dist_ap - dist_an + margin, 0.0))
    prec = jnp.sum(dist_an > dist_ap).astype(jnp.float32) / n
    return loss, prec


if __name__ == "__main__":
    key = jax.random.PRNGKey(0)

    # Small deterministic example: batch of 8 embeddings, feature dim 32, 4 classes.
    N, D = 8, 32
    k0, k1, k2 = jax.random.split(key, 3)
    inputs = jax.random.normal(k0, (N, D), dtype=jnp.float32)
    labels = jnp.array([0, 0, 1, 1, 2, 2, 3, 3], dtype=jnp.int32)

    loss, prec = triplet_loss(inputs, labels, margin=0.3)
    loss = jax.block_until_ready(loss)
    prec = jax.block_until_ready(prec)
    loss_ref, prec_ref = _triplet_loss_ref(inputs, labels, margin=0.3)
    np.testing.assert_allclose(np.asarray(loss), np.asarray(loss_ref), rtol=1e-5, atol=1e-5)
    np.testing.assert_allclose(np.asarray(prec), np.asarray(prec_ref), rtol=1e-6, atol=1e-6)

    # Secondary check exercising the multi-block (padded, 2x2 grid) path.
    N2, D2 = 300, 48
    inputs2 = jax.random.normal(k1, (N2, D2), dtype=jnp.float32)
    labels2 = jax.random.randint(k2, (N2,), 0, 5, dtype=jnp.int32)
    loss2, prec2 = triplet_loss(inputs2, labels2, margin=0.3)
    loss2 = jax.block_until_ready(loss2)
    prec2 = jax.block_until_ready(prec2)
    loss2_ref, prec2_ref = _triplet_loss_ref(inputs2, labels2, margin=0.3)
    np.testing.assert_allclose(np.asarray(loss2), np.asarray(loss2_ref), rtol=1e-4, atol=1e-4)
    np.testing.assert_allclose(np.asarray(prec2), np.asarray(prec2_ref), rtol=1e-6, atol=1e-6)

    # bf16-MXU path: compile/run smoke check (not bit-identical to the f32 reference).
    loss_bf16, prec_bf16 = triplet_loss(inputs2, labels2, margin=0.3, use_bf16_matmul=True)
    loss_bf16, prec_bf16 = jax.block_until_ready((loss_bf16, prec_bf16))
    assert bool(jnp.isfinite(loss_bf16)) and bool(jnp.isfinite(prec_bf16))

    print("KERNEL_OK")
</pallas_src>

<mosaic_0001>
module attributes {stable_mosaic.version = 11 : i64} {
  func.func @_triplet_tile_kernel(%arg0: i32, %arg1: i32, %arg2: memref<8x32xf32, #tpu.memory_space<vmem>>, %arg3: memref<8x32xf32, #tpu.memory_space<vmem>>, %arg4: memref<8x1xf32, #tpu.memory_space<vmem>>, %arg5: memref<1x8xf32, #tpu.memory_space<vmem>>, %arg6: memref<8x1xi32, #tpu.memory_space<vmem>>, %arg7: memref<1x8xi32, #tpu.memory_space<vmem>>, %arg8: memref<8x1xf32, #tpu.memory_space<vmem>>, %arg9: memref<8x1xf32, #tpu.memory_space<vmem>>) attributes {dimension_semantics = [#tpu.dimension_semantics<parallel>, #tpu.dimension_semantics<arbitrary>], iteration_bounds = array<i64: 1, 1>, scalar_prefetch = 0 : i64, scratch_operands = 0 : i64, tpu.core_type = #tpu.core_type<tc>, window_params = [{transform_indices = @transform_0, window_bounds = array<i64: 8, 32>}, {transform_indices = @transform_1, window_bounds = array<i64: 8, 32>}, {transform_indices = @transform_2, window_bounds = array<i64: 8, 1>}, {transform_indices = @transform_3, window_bounds = array<i64: 1, 8>}, {transform_indices = @transform_4, window_bounds = array<i64: 8, 1>}, {transform_indices = @transform_5, window_bounds = array<i64: 1, 8>}, {transform_indices = @transform_6, window_bounds = array<i64: 8, 1>}, {transform_indices = @transform_7, window_bounds = array<i64: 8, 1>}]} {
    %c0_i32 = arith.constant 0 : i32
    %0 = arith.cmpi eq, %arg1, %c0_i32 : i32
    %1 = arith.extui %0 : i1 to i32
    %c0_i32_0 = arith.constant 0 : i32
    %2 = arith.cmpi ne, %1, %c0_i32_0 : i32
    scf.if %2 {
      %cst_26 = arith.constant 0xFF800000 : f32
      %35 = vector.broadcast %cst_26 : f32 to vector<8x1xf32>
      %c0_27 = arith.constant 0 : index
      %c0_28 = arith.constant 0 : index
      %36 = vector.load %arg8[%c0_27, %c0_28] : memref<8x1xf32, #tpu.memory_space<vmem>>, vector<8x1xf32>
      tpu.vector_store %arg8[%c0_27, %c0_28], %35 {strides = array<i32>} : memref<8x1xf32, #tpu.memory_space<vmem>>, vector<8x1xf32>,
      %cst_29 = arith.constant 0x7F800000 : f32
      %37 = vector.broadcast %cst_29 : f32 to vector<8x1xf32>
      %c0_30 = arith.constant 0 : index
      %c0_31 = arith.constant 0 : index
      %38 = vector.load %arg9[%c0_30, %c0_31] : memref<8x1xf32, #tpu.memory_space<vmem>>, vector<8x1xf32>
      tpu.vector_store %arg9[%c0_30, %c0_31], %37 {strides = array<i32>} : memref<8x1xf32, #tpu.memory_space<vmem>>, vector<8x1xf32>,
    } else {
    }
    %c0 = arith.constant 0 : index
    %c0_1 = arith.constant 0 : index
    %3 = vector.load %arg2[%c0, %c0_1] : memref<8x32xf32, #tpu.memory_space<vmem>>, vector<8x32xf32>
    %c0_2 = arith.constant 0 : index
    %c0_3 = arith.constant 0 : index
    %4 = vector.load %arg3[%c0_2, %c0_3] : memref<8x32xf32, #tpu.memory_space<vmem>>, vector<8x32xf32>
    %cst = arith.constant dense<0.000000e+00> : vector<8x8xf32>
    %5 = tpu.matmul %3, %4, %cst {dimension_numbers = #tpu.dot_dimension_numbers<[1], [1], [0], [0], [0, 0, 1, 0], [], []>} : vector<8x32xf32>, vector<8x32xf32>, vector<8x8xf32> -> vector<8x8xf32>
    %c0_4 = arith.constant 0 : index
    %c0_5 = arith.constant 0 : index
    %6 = vector.load %arg4[%c0_4, %c0_5] : memref<8x1xf32, #tpu.memory_space<vmem>>, vector<8x1xf32>
    %c0_6 = arith.constant 0 : index
    %c0_7 = arith.constant 0 : index
    %7 = vector.load %arg5[%c0_6, %c0_7] : memref<1x8xf32, #tpu.memory_space<vmem>>, vector<1x8xf32>
    %8 = vector.broadcast %6 : vector<8x1xf32> to vector<8x8xf32>
    %9 = vector.broadcast %7 : vector<1x8xf32> to vector<8x8xf32>
    %10 = arith.addf %8, %9 : vector<8x8xf32>
    %cst_8 = arith.constant 2.000000e+00 : f32
    %11 = vector.broadcast %cst_8 : f32 to vector<8x8xf32>
    %12 = arith.mulf %11, %5 : vector<8x8xf32>
    %13 = arith.subf %10, %12 : vector<8x8xf32>
    %cst_9 = arith.constant 9.99999996E-13 : f32
    %14 = vector.broadcast %cst_9 : f32 to vector<8x8xf32>
    %15 = arith.maximumf %13, %14 : vector<8x8xf32>
    %c0_10 = arith.constant 0 : index
    %c0_11 = arith.constant 0 : index
    %16 = vector.load %arg6[%c0_10, %c0_11] : memref<8x1xi32, #tpu.memory_space<vmem>>, vector<8x1xi32>
    %c0_12 = arith.constant 0 : index
    %c0_13 = arith.constant 0 : index
    %17 = vector.load %arg7[%c0_12, %c0_13] : memref<1x8xi32, #tpu.memory_space<vmem>>, vector<1x8xi32>
    %18 = vector.broadcast %16 : vector<8x1xi32> to vector<8x8xi32>
    %19 = vector.broadcast %17 : vector<1x8xi32> to vector<8x8xi32>
    %20 = arith.cmpi eq, %18, %19 : vector<8x8xi32>
    %cst_14 = arith.constant 0xFF800000 : f32
    %21 = vector.broadcast %cst_14 : f32 to vector<8x8xf32>
    %22 = arith.select %20, %15, %21 : vector<8x8xi1>, vector<8x8xf32>
    %cst_15 = arith.constant dense<0xFF800000> : vector<8xf32>
    %23 = vector.multi_reduction <maximumf>, %22, %cst_15 [1] : vector<8x8xf32> to vector<8xf32>
    %24 = vector.shape_cast %23 : vector<8xf32> to vector<8x1xf32>
    %cst_16 = arith.constant 0x7F800000 : f32
    %25 = vector.broadcast %cst_16 : f32 to vector<8x8xf32>
    %26 = arith.select %20, %25, %15 : vector<8x8xi1>, vector<8x8xf32>
    %cst_17 = arith.constant dense<0x7F800000> : vector<8xf32>
    %27 = vector.multi_reduction <minimumf>, %26, %cst_17 [1] : vector<8x8xf32> to vector<8xf32>
    %28 = vector.shape_cast %27 : vector<8xf32> to vector<8x1xf32>
    %c0_18 = arith.constant 0 : index
    %c0_19 = arith.constant 0 : index
    %29 = vector.load %arg8[%c0_18, %c0_19] : memref<8x1xf32, #tpu.memory_space<vmem>>, vector<8x1xf32>
    %30 = arith.maximumf %29, %24 : vector<8x1xf32>
    %c0_20 = arith.constant 0 : index
    %c0_21 = arith.constant 0 : index
    %31 = vector.load %arg8[%c0_20, %c0_21] : memref<8x1xf32, #tpu.memory_space<vmem>>, vector<8x1xf32>
    tpu.vector_store %arg8[%c0_20, %c0_21], %30 {strides = array<i32>} : memref<8x1xf32, #tpu.memory_space<vmem>>, vector<8x1xf32>,
    %c0_22 = arith.constant 0 : index
    %c0_23 = arith.constant 0 : index
    %32 = vector.load %arg9[%c0_22, %c0_23] : memref<8x1xf32, #tpu.memory_space<vmem>>, vector<8x1xf32>
    %33 = arith.minimumf %32, %28 : vector<8x1xf32>
    %c0_24 = arith.constant 0 : index
    %c0_25 = arith.constant 0 : index
    %34 = vector.load %arg9[%c0_24, %c0_25] : memref<8x1xf32, #tpu.memory_space<vmem>>, vector<8x1xf32>
    tpu.vector_store %arg9[%c0_24, %c0_25], %33 {strides = array<i32>} : memref<8x1xf32, #tpu.memory_space<vmem>>, vector<8x1xf32>,
    return
  }
  func.func @transform_0(%arg0: i32, %arg1: i32) -> (i32, i32) {
    %c0_i32 = arith.constant 0 : i32
    %c0_i32_0 = arith.constant 0 : i32
    return %arg0, %c0_i32 : i32, i32
  }
  func.func @transform_1(%arg0: i32, %arg1: i32) -> (i32, i32) {
    %c0_i32 = arith.constant 0 : i32
    %c0_i32_0 = arith.constant 0 : i32
    return %arg1, %c0_i32 : i32, i32
  }
  func.func @transform_2(%arg0: i32, %arg1: i32) -> (i32, i32) {
    %c0_i32 = arith.constant 0 : i32
    %c0_i32_0 = arith.constant 0 : i32
    return %arg0, %c0_i32 : i32, i32
  }
  func.func @transform_3(%arg0: i32, %arg1: i32) -> (i32, i32) {
    %c0_i32 = arith.constant 0 : i32
    %c0_i32_0 = arith.constant 0 : i32
    return %c0_i32, %arg1 : i32, i32
  }
  func.func @transform_4(%arg0: i32, %arg1: i32) -> (i32, i32) {
    %c0_i32 = arith.constant 0 : i32
    %c0_i32_0 = arith.constant 0 : i32
    return %arg0, %c0_i32 : i32, i32
  }
  func.func @transform_5(%arg0: i32, %arg1: i32) -> (i32, i32) {
    %c0_i32 = arith.constant 0 : i32
    %c0_i32_0 = arith.constant 0 : i32
    return %c0_i32, %arg1 : i32, i32
  }
  func.func @transform_6(%arg0: i32, %arg1: i32) -> (i32, i32) {
    %c0_i32 = arith.constant 0 : i32
    %c0_i32_0 = arith.constant 0 : i32
    return %arg0, %c0_i32 : i32, i32
  }
  func.func @transform_7(%arg0: i32, %arg1: i32) -> (i32, i32) {
    %c0_i32 = arith.constant 0 : i32
    %c0_i32_0 = arith.constant 0 : i32
    return %arg0, %c0_i32 : i32, i32
  }
}

</mosaic_0001>

<llo_original>
// kernel: tpu_custom_call.1
$region0: #{tpu_custom_call.1}
  #allocation0 [shape = 'u32[]', space=smem, size = 0x4, offset = 0x4, fixed_abs, tag = 'smem constant byte address 0x4 - core index']
  #allocation1 [shape = 'u32[144,128]{1,0:T(1,128)}', space=vmem, size = 0x12000, scoped, tag = 'internal scratch']
  %s0 = inlined_call_operand.vmem [shape: f32[8,32], index: 0, kind: input, shape index: {}]
  %s1 = inlined_call_operand.vmem [shape: f32[8,32], index: 1, kind: input, shape index: {}]
  %s2 = inlined_call_operand.vmem [shape: f32[8,1], index: 2, kind: input, shape index: {}]
  %s3 = inlined_call_operand.vmem [shape: f32[1,8], index: 3, kind: input, shape index: {}]
  %s4 = inlined_call_operand.vmem [shape: s32[8,1], index: 4, kind: input, shape index: {}]
  %s5 = inlined_call_operand.vmem [shape: s32[1,8], index: 5, kind: input, shape index: {}]
  %s6 = inlined_call_operand.vmem [shape: f32[8,1], index: 6, kind: output, shape index: {0}]
  %s7 = inlined_call_operand.vmem [shape: f32[8,1], index: 7, kind: output, shape index: {1}]
  %8 = xla_tuple %s6, %s7
  %s9 = sld [smem:[#allocation0]]
  $region46: #{tpu_custom_call.1} parent=0
    _
  %s11 = ssub.s32 1, %s9
  %s12 = scalar_select 0, %s11, %s9
  // Predicated region
  $region2: #{tpu_custom_call.1} parent=0 // pred_check
    _
  $region3: #{tpu_custom_call.1} parent=0 // pred_check_branch
    %14 = sbr.rel (0) target = $region5
  $region4: #{tpu_custom_call.1} parent=0 // pred_region
    _
  $region5: #{tpu_custom_call.1} parent=0 // pred_fallthru
    _
  // Predicated region
  $region6: #{tpu_custom_call.1} parent=0 // pred_check
    _
  $region7: #{tpu_custom_call.1} parent=0 // pred_check_branch
    %16 = sbr.rel (0) target = $region9
  $region8: #{tpu_custom_call.1} parent=0 // pred_region
    _
  $region9: #{tpu_custom_call.1} parent=0 // pred_fallthru
    _
  // Predicated region
  $region10: #{tpu_custom_call.1} parent=0 // pred_check
    _
  $region11: #{tpu_custom_call.1} parent=0 // pred_check_branch
    %18 = sbr.rel (0) target = $region13
  $region12: #{tpu_custom_call.1} parent=0 // pred_region
    _
  $region13: #{tpu_custom_call.1} parent=0 // pred_fallthru
    _
  // Predicated region
  $region14: #{tpu_custom_call.1} parent=0 // pred_check
    _
  $region15: #{tpu_custom_call.1} parent=0 // pred_check_branch
    %20 = sbr.rel (0) target = $region17
  $region16: #{tpu_custom_call.1} parent=0 // pred_region
    _
  $region17: #{tpu_custom_call.1} parent=0 // pred_fallthru
    _
  // Predicated region
  $region18: #{tpu_custom_call.1} parent=0 // pred_check
    _
  $region19: #{tpu_custom_call.1} parent=0 // pred_check_branch
    %22 = sbr.rel (0) target = $region21
  $region20: #{tpu_custom_call.1} parent=0 // pred_region
    _
  $region21: #{tpu_custom_call.1} parent=0 // pred_fallthru
    _
  // Predicated region
  $region22: #{tpu_custom_call.1} parent=0 // pred_check
    _
  $region23: #{tpu_custom_call.1} parent=0 // pred_check_branch
    %24 = sbr.rel (0) target = $region25
  $region24: #{tpu_custom_call.1} parent=0 // pred_region
    _
  $region25: #{tpu_custom_call.1} parent=0 // pred_fallthru
    _
  %p25 = scmp.eq.s32.totalorder 0, 0
  // Predicated region
  $region26: #{tpu_custom_call.1} parent=0 // pred_check
    %p26 = pneg %p25
  $region27: #{tpu_custom_call.1} parent=0 // pred_check_branch
    %28 = sbr.rel (%p26) target = $region29
  $region28: #{tpu_custom_call.1} parent=0 // pred_region
    %vm29 = vcmask 7168
    %30 = vst.msk [vmem:[%s6] sm:$0xff] %vm29, -inf
    %31 = vst.msk [vmem:[%s7] sm:$0xff] %vm29, inf
  $region29: #{tpu_custom_call.1} parent=0 // pred_fallthru
    _
  %v32 = vld [vmem:[%s0] sm:$0xff]
  %v33 = vld [vmem:[%s1] sm:$0xff]
  %vm34 = vcmask 261120
  %v36 = vsel %vm34, %v32, 0
  %v39 = vsel %vm34, %v33, 0
  %41 = vmatprep.subr.mxu0 0.0
  %42 = vmatpush1.xpose.msra.mxu0 %v39
  %43 = vmatprep.subr.mxu0 0.0
  %44 = vmatpush1.xpose.msra.mxu0 0.0
  %45 = vmatprep.subr.mxu0 0.0
  %46 = vmatpush1.xpose.msra.mxu0 0.0
  %47 = vmatprep.subr.mxu0 0.0
  %48 = vmatpush1.xpose.msra.mxu0 0.0
  %49 = vmatprep.subr.mxu0 0.0
  %50 = vmatpush1.xpose.msra.mxu0 0.0
  %51 = vmatprep.subr.mxu0 0.0
  %52 = vmatpush1.xpose.msra.mxu0 0.0
  %53 = vmatprep.subr.mxu0 0.0
  %54 = vmatpush1.xpose.msra.mxu0 0.0
  %55 = vmatprep.subr.mxu0 0.0
  %56 = vmatpush1.xpose.msra.mxu0 0.0
  %57 = vmatprep.subr.mxu0 0.0
  %58 = vmatpush1.xpose.msra.mxu0 0.0
  %59 = vmatprep.subr.mxu0 0.0
  %60 = vmatpush1.xpose.msra.mxu0 0.0
  %61 = vmatprep.subr.mxu0 0.0
  %62 = vmatpush1.xpose.msra.mxu0 0.0
  %63 = vmatprep.subr.mxu0 0.0
  %64 = vmatpush1.xpose.msra.mxu0 0.0
  %65 = vmatprep.subr.mxu0 0.0
  %66 = vmatpush1.xpose.msra.mxu0 0.0
  %67 = vmatprep.subr.mxu0 0.0
  %68 = vmatpush1.xpose.msra.mxu0 0.0
  %69 = vmatprep.subr.mxu0 0.0
  %70 = vmatpush1.xpose.msra.mxu0 0.0
  %71 = vmatprep.subr.mxu0 0.0
  %72 = vmatpush1.xpose.msra.mxu0 0.0
  %73 = vmatprep.subr.mxu0 0.0
  %74 = vmatpush1.xpose.msra.mxu0 0.0
  %75 = vmatprep.subr.mxu0 0.0
  %76 = vmatpush1.xpose.msra.mxu0 0.0
  %77 = vmatprep.subr.mxu0 0.0
  %78 = vmatpush1.xpose.msra.mxu0 0.0
  %79 = vmatprep.subr.mxu0 0.0
  %80 = vmatpush1.xpose.msra.mxu0 0.0
  %81 = vmatprep.subr.mxu0 0.0
  %82 = vmatpush1.xpose.msra.mxu0 0.0
  %83 = vmatprep.subr.mxu0 0.0
  %84 = vmatpush1.xpose.msra.mxu0 0.0
  %85 = vmatprep.subr.mxu0 0.0
  %86 = vmatpush1.xpose.msra.mxu0 0.0
  %87 = vmatprep.subr.mxu0 0.0
  %88 = vmatpush1.xpose.msra.mxu0 0.0
  %89 = vmatprep.subr.mxu0 0.0
  %90 = vmatpush1.xpose.msra.mxu0 0.0
  %91 = vmatprep.subr.mxu0 0.0
  %92 = vmatpush1.xpose.msra.mxu0 0.0
  %93 = vmatprep.subr.mxu0 0.0
  %94 = vmatpush1.xpose.msra.mxu0 0.0
  %95 = vmatprep.subr.mxu0 0.0
  %96 = vmatpush1.xpose.msra.mxu0 0.0
  %97 = vmatprep.subr.mxu0 0.0
  %98 = vmatpush1.xpose.msra.mxu0 0.0
  %99 = vmatprep.subr.mxu0 0.0
  %100 = vmatpush1.xpose.msra.mxu0 0.0
  %101 = vmatprep.subr.mxu0 0.0
  %102 = vmatpush1.xpose.msra.mxu0 0.0
  %103 = vmatprep.subr.mxu0 0.0
  %104 = vmatpush1.xpose.msra.mxu0 0.0
  %105 = vmatprep.mubr.f32.mxu0 0.0
  %106 = vmatmul.mubr.f32.gmra.mrb[0].mxu0 %v36
  %v107 = vpop.f32.mrb[0].mxu0
  %v108 = vadd.f32 0.0, %v107
  %v109 = vpop.f32.mrb[0].mxu0
  %110 = vdwg.mxu0
  %v111 = vld [vmem:[%s2] sm:$0xff]
  %v112 = vld [vmem:[%s3] sm:$0x1]
  %114 = vset.pattern.permute.xlu0 0
  %115 = vperm.xlu0 %114, %v111
  %v116 = vpop.permute.xlu0 %115
  %v119 = vlaneseq
  %v120 = vshrl.u32 %v119, 7
  %v121 = vsub.s32 0, %v120
  %v122 = vrot.slane %v112, %v121
  %v124 = vadd.f32 %v116, %v122
  %v125 = vmul.f32 %v108, 2.0
  %v126 = vsub.f32 %v124, %v125
  %v127 = vmax.f32 %v126, 1e-12
  %v128 = vld [vmem:[%s4] sm:$0xff]
  %v129 = vld [vmem:[%s5] sm:$0x1]
  %130 = vset.pattern.permute.xlu0 0
  %131 = vperm.xlu0 %130, %v128
  %v132 = vpop.permute.xlu0 %131
  %v133 = vlaneseq
  %v134 = vshrl.u32 %v133, 7
  %v135 = vsub.s32 0, %v134
  %v136 = vrot.slane %v129, %v135
  %vm137 = vcmp.eq.s32.totalorder %v132, %v136
  %v138 = vsel %vm137, %v127, -inf
  %vm139 = vcmask 64512
  %v140 = vsel %vm139, %v138, -inf
  %141 = vmax.xlane.f32.xlu0 %v140
  %v142 = vpop.xlane.xlu0 %141
  %v143 = vsel %vm137, inf, %v127
  %v144 = vsel %vm139, %v143, inf
  %145 = vmin.xlane.f32.xlu0 %v144
  %v146 = vpop.xlane.xlu0 %145
  %v147 = vld [vmem:[%s6] sm:$0xff]
  %v148 = vmax.f32 %v147, %v142
  %vm149 = vcmask 7168
  %150 = vst.msk [vmem:[%s6] sm:$0xff] %vm149, %v148
  %v151 = vld [vmem:[%s7] sm:$0xff]
  %v152 = vmin.f32 %v151, %v146
  %153 = vst.msk [vmem:[%s7] sm:$0xff] %vm149, %v152
  // Predicated region
  $region30: #{tpu_custom_call.1} parent=0 // pred_check
    _
  $region31: #{tpu_custom_call.1} parent=0 // pred_check_branch
    %155 = sbr.rel (0) target = $region33
  $region32: #{tpu_custom_call.1} parent=0 // pred_region
    _
  $region33: #{tpu_custom_call.1} parent=0 // pred_fallthru
    _
  // Predicated region
  $region34: #{tpu_custom_call.1} parent=0 // pred_check
    _
  $region35: #{tpu_custom_call.1} parent=0 // pred_check_branch
    %157 = sbr.rel (0) target = $region37
  $region36: #{tpu_custom_call.1} parent=0 // pred_region
    _
  $region37: #{tpu_custom_call.1} parent=0 // pred_fallthru
    _
  // Predicated region
  $region38: #{tpu_custom_call.1} parent=0 // pred_check
    _
  $region39: #{tpu_custom_call.1} parent=0 // pred_check_branch
    %159 = sbr.rel (0) target = $region41
  $region40: #{tpu_custom_call.1} parent=0 // pred_region
    _
  $region41: #{tpu_custom_call.1} parent=0 // pred_fallthru
    _
  // Predicated region
  $region42: #{tpu_custom_call.1} parent=0 // pred_check
    _
  $region43: #{tpu_custom_call.1} parent=0 // pred_check_branch
    %161 = sbr.rel (0) target = $region45
  $region44: #{tpu_custom_call.1} parent=0 // pred_region
    _
  $region45: #{tpu_custom_call.1} parent=0 // pred_fallthru
    _

</llo_original>
